<compile_context>
chip_gen: v6e
topology: v6e:2x2x1
jax: 0.10.0
libtpu: 0.0.40
codegen_flags: <defaults>
</compile_context>

<pallas_src>
import jax
import jax.numpy as jnp
import numpy as np
from jax.experimental import pallas as pl
from jax.experimental.pallas import tpu as pltpu

N_FEATURE = 19
N_HIDDEN = 25
N_HIDDEN_1 = 30
N_OUTPUT = 5

MAX_TB = 16384          # batch columns per grid step (lane axis)
SMALL_BATCH_MAX = 512   # below this, plain XLA beats kernel launch overhead


def _round_up(n, m):
    return ((n + m - 1) // m) * m


def _choose_tb(B):
    """Lane-axis tile: multiple of 128, capped, and <= ceil(B/2) for moderate B
    so grid >= 2 and both v7x TensorCores get work."""
    if B <= 256:
        return _round_up(B, 128)
    return min(MAX_TB, _round_up((B + 1) // 2, 128))


def dqn_kernel(x_ref, w1_ref, b1_ref, w2_ref, b2_ref, w3_ref, b3_ref, o_ref):
    # x: [19, tb] (features on sublanes, batch on lanes)
    x = x_ref[...]
    if x.dtype != jnp.bfloat16:
        x = x.astype(jnp.bfloat16)
    # layer 1: ReLU(W1 @ X + b1)  -> [25, tb], bf16 MXU, f32 accumulate
    h1 = jnp.dot(w1_ref[...], x, preferred_element_type=jnp.float32)
    h1 = jnp.maximum(h1 + b1_ref[...], 0.0)
    # dropout: identity at inference time
    # layer 2: ReLU(W2 @ H1 + b2) -> [30, tb]
    h2 = jnp.dot(w2_ref[...], h1.astype(jnp.bfloat16),
                 preferred_element_type=jnp.float32)
    h2 = jnp.maximum(h2 + b2_ref[...], 0.0)
    # output layer: W3 @ H2 + b3 -> [5, tb] (no activation), lane-dense store
    out = jnp.dot(w3_ref[...], h2.astype(jnp.bfloat16),
                  preferred_element_type=jnp.float32)
    o_ref[...] = out + b3_ref[...]


def _dqn_pallas(x_fm, params):
    """x_fm: [19, B] (f32 or bf16) -> [5, B] f32."""
    w1, b1, w2, b2, w3, b3 = params
    B = x_fm.shape[1]
    tb = _choose_tb(B)
    grid = (pl.cdiv(B, tb),)

    const = lambda shape: pl.BlockSpec(shape, lambda i: (0, 0))

    return pl.pallas_call(
        dqn_kernel,
        out_shape=jax.ShapeDtypeStruct((N_OUTPUT, B), jnp.float32),
        grid=grid,
        in_specs=[
            pl.BlockSpec((N_FEATURE, tb), lambda i: (0, i)),          # X tile
            const((N_HIDDEN, N_FEATURE)),   const((N_HIDDEN, 1)),      # W1, b1
            const((N_HIDDEN_1, N_HIDDEN)),  const((N_HIDDEN_1, 1)),    # W2, b2
            const((N_OUTPUT, N_HIDDEN_1)),  const((N_OUTPUT, 1)),      # W3, b3
        ],
        out_specs=pl.BlockSpec((N_OUTPUT, tb), lambda i: (0, i)),
        compiler_params=pltpu.CompilerParams(
            dimension_semantics=("parallel",),
            # sized to padded feature-major tiles; safe on v7x (64 MiB phys)
            vmem_limit_bytes=48 << 20,
        ),
    )(x_fm, w1, b1, w2, b2, w3, b3)


@jax.jit
def dqn_forward_fm(x_fm, params):
    """Feature-major entry point: x_fm [19, B] -> [5, B] (no transposes)."""
    return _dqn_pallas(x_fm, params)


@jax.jit
def dqn_forward(x, params):
    """Batch-major entry point: x [B, 19] -> [B, 5] (one transpose each way)."""
    return _dqn_pallas(x.T, params).T


def _dqn_dense(x, params):
    """Plain fused-XLA path for tiny batches (uses the same prepared params)."""
    w1, b1, w2, b2, w3, b3 = params
    f32 = jnp.float32
    h1 = jnp.maximum(x.astype(f32) @ w1.astype(f32).T + b1.reshape(-1), 0.0)
    h2 = jnp.maximum(h1 @ w2.astype(f32).T + b2.reshape(-1), 0.0)
    return h2 @ w3.astype(f32).T + b3.reshape(-1)


_dqn_dense_jit = jax.jit(_dqn_dense)


def dqn_apply(x, params):
    """Dispatch: small/online batches -> fused XLA; replay batches -> Pallas."""
    if x.shape[0] <= SMALL_BATCH_MAX:
        return _dqn_dense_jit(x, params)
    return dqn_forward(x, params)


def init_params(key):
    """Raw f32 params matching the torch module (weights torch-native [out, in]).

    Weights: xavier_normal with gain=sqrt(2); biases: uniform(-1/sqrt(fan_in),
    1/sqrt(fan_in)) like torch.nn.Linear's default.
    """
    ks = jax.random.split(key, 6)

    def xavier_normal(k, fan_out, fan_in, gain):
        std = gain * np.sqrt(2.0 / (fan_in + fan_out))
        return (std * jax.random.normal(k, (fan_out, fan_in))).astype(jnp.float32)

    def bias_uniform(k, fan_in, fan_out):
        bound = 1.0 / np.sqrt(fan_in)
        return jax.random.uniform(
            k, (fan_out,), minval=-bound, maxval=bound, dtype=jnp.float32)

    gain = np.sqrt(2.0)
    w1 = xavier_normal(ks[0], N_HIDDEN, N_FEATURE, gain)
    b1 = bias_uniform(ks[1], N_FEATURE, N_HIDDEN)
    w2 = xavier_normal(ks[2], N_HIDDEN_1, N_HIDDEN, gain)
    b2 = bias_uniform(ks[3], N_HIDDEN, N_HIDDEN_1)
    w3 = xavier_normal(ks[4], N_OUTPUT, N_HIDDEN_1, gain)
    b3 = bias_uniform(ks[5], N_HIDDEN_1, N_OUTPUT)
    return (w1, b1, w2, b2, w3, b3)


def prepare_params(raw):
    """One-time preprocessing (outside the per-call path): weights -> bf16
    [out, in]; biases -> f32 [out, 1] (broadcast along the lane/batch axis)."""
    w1, b1, w2, b2, w3, b3 = raw
    return (
        w1.astype(jnp.bfloat16), b1.reshape(-1, 1).astype(jnp.float32),
        w2.astype(jnp.bfloat16), b2.reshape(-1, 1).astype(jnp.float32),
        w3.astype(jnp.bfloat16), b3.reshape(-1, 1).astype(jnp.float32),
    )


def dqn_reference(x, raw_params):
    """Pure-JAX f32 reference with torch-native [out, in] weights."""
    w1, b1, w2, b2, w3, b3 = raw_params
    h1 = jnp.maximum(x @ w1.T + b1, 0.0)
    h2 = jnp.maximum(h1 @ w2.T + b2, 0.0)
    return h2 @ w3.T + b3


if __name__ == "__main__":
    key = jax.random.PRNGKey(0)
    k_param, k_x = jax.random.split(key)
    raw = init_params(k_param)
    params = prepare_params(raw)

    # 1) small batch through the Pallas kernel path (single, partial lane tile)
    B = 2
    x = jax.random.normal(k_x, (B, N_FEATURE), dtype=jnp.float32)
    out = dqn_forward(x, params)
    jax.block_until_ready(out)
    assert out.shape == (B, N_OUTPUT)
    np.testing.assert_allclose(np.asarray(out),
                               np.asarray(dqn_reference(x, raw)),
                               rtol=5e-2, atol=5e-2)

    # 2) multi-step grid (>= 2 tiles for megacore) + partial last tile
    B2 = 1000
    x2 = jax.random.normal(jax.random.PRNGKey(1), (B2, N_FEATURE),
                           dtype=jnp.float32)
    out2 = dqn_forward(x2, params)
    jax.block_until_ready(out2)
    np.testing.assert_allclose(np.asarray(out2),
                               np.asarray(dqn_reference(x2, raw)),
                               rtol=5e-2, atol=5e-2)

    # 3) feature-major entry point (no wrapper transposes)
    out3 = dqn_forward_fm(jnp.asarray(x2.T), params)
    jax.block_until_ready(out3)
    np.testing.assert_allclose(np.asarray(out3),
                               np.asarray(dqn_reference(x2, raw)).T,
                               rtol=5e-2, atol=5e-2)

    # 4) small-batch dispatch falls back to the fused XLA path
    out4 = dqn_apply(x, params)
    jax.block_until_ready(out4)
    np.testing.assert_allclose(np.asarray(out4),
                               np.asarray(dqn_reference(x, raw)),
                               rtol=5e-2, atol=5e-2)

    print("KERNEL_OK")
</pallas_src>

<mosaic_0001>
module attributes {stable_mosaic.version = 11 : i64} {
  func.func @dqn_kernel(%arg0: i32, %arg1: memref<19x128xf32, #tpu.memory_space<vmem>>, %arg2: memref<25x19xbf16, #tpu.memory_space<vmem>>, %arg3: memref<25x1xf32, #tpu.memory_space<vmem>>, %arg4: memref<30x25xbf16, #tpu.memory_space<vmem>>, %arg5: memref<30x1xf32, #tpu.memory_space<vmem>>, %arg6: memref<5x30xbf16, #tpu.memory_space<vmem>>, %arg7: memref<5x1xf32, #tpu.memory_space<vmem>>, %arg8: memref<5x128xf32, #tpu.memory_space<vmem>>) attributes {dimension_semantics = [#tpu.dimension_semantics<parallel>], iteration_bounds = array<i64: 1>, scalar_prefetch = 0 : i64, scratch_operands = 0 : i64, tpu.core_type = #tpu.core_type<tc>, window_params = [{transform_indices = @transform_0, window_bounds = array<i64: 19, 128>}, {pipeline_mode = #tpu.pipeline_mode<synchronous>, transform_indices = @transform_1, window_bounds = array<i64: 25, 19>}, {pipeline_mode = #tpu.pipeline_mode<synchronous>, transform_indices = @transform_2, window_bounds = array<i64: 25, 1>}, {pipeline_mode = #tpu.pipeline_mode<synchronous>, transform_indices = @transform_3, window_bounds = array<i64: 30, 25>}, {pipeline_mode = #tpu.pipeline_mode<synchronous>, transform_indices = @transform_4, window_bounds = array<i64: 30, 1>}, {pipeline_mode = #tpu.pipeline_mode<synchronous>, transform_indices = @transform_5, window_bounds = array<i64: 5, 30>}, {pipeline_mode = #tpu.pipeline_mode<synchronous>, transform_indices = @transform_6, window_bounds = array<i64: 5, 1>}, {transform_indices = @transform_7, window_bounds = array<i64: 5, 128>}]} {
    %c0 = arith.constant 0 : index
    %c0_0 = arith.constant 0 : index
    %0 = vector.load %arg1[%c0, %c0_0] : memref<19x128xf32, #tpu.memory_space<vmem>>, vector<19x128xf32>
    %1 = arith.truncf %0 : vector<19x128xf32> to vector<19x128xbf16>
    %c0_1 = arith.constant 0 : index
    %c0_2 = arith.constant 0 : index
    %2 = vector.load %arg2[%c0_1, %c0_2] : memref<25x19xbf16, #tpu.memory_space<vmem>>, vector<25x19xbf16>
    %cst = arith.constant dense<0.000000e+00> : vector<25x128xf32>
    %3 = tpu.matmul %2, %1, %cst {dimension_numbers = #tpu.dot_dimension_numbers<[1], [0], [0], [1], [0, 0, 1, 1], [], []>} : vector<25x19xbf16>, vector<19x128xbf16>, vector<25x128xf32> -> vector<25x128xf32>
    %c0_3 = arith.constant 0 : index
    %c0_4 = arith.constant 0 : index
    %4 = vector.load %arg3[%c0_3, %c0_4] : memref<25x1xf32, #tpu.memory_space<vmem>>, vector<25x1xf32>
    %5 = vector.broadcast %4 : vector<25x1xf32> to vector<25x128xf32>
    %6 = arith.addf %3, %5 : vector<25x128xf32>
    %cst_5 = arith.constant 0.000000e+00 : f32
    %7 = vector.broadcast %cst_5 : f32 to vector<25x128xf32>
    %8 = arith.maximumf %6, %7 : vector<25x128xf32>
    %c0_6 = arith.constant 0 : index
    %c0_7 = arith.constant 0 : index
    %9 = vector.load %arg4[%c0_6, %c0_7] : memref<30x25xbf16, #tpu.memory_space<vmem>>, vector<30x25xbf16>
    %10 = arith.truncf %8 : vector<25x128xf32> to vector<25x128xbf16>
    %cst_8 = arith.constant dense<0.000000e+00> : vector<30x128xf32>
    %11 = tpu.matmul %9, %10, %cst_8 {dimension_numbers = #tpu.dot_dimension_numbers<[1], [0], [0], [1], [0, 0, 1, 1], [], []>} : vector<30x25xbf16>, vector<25x128xbf16>, vector<30x128xf32> -> vector<30x128xf32>
    %c0_9 = arith.constant 0 : index
    %c0_10 = arith.constant 0 : index
    %12 = vector.load %arg5[%c0_9, %c0_10] : memref<30x1xf32, #tpu.memory_space<vmem>>, vector<30x1xf32>
    %13 = vector.broadcast %12 : vector<30x1xf32> to vector<30x128xf32>
    %14 = arith.addf %11, %13 : vector<30x128xf32>
    %cst_11 = arith.constant 0.000000e+00 : f32
    %15 = vector.broadcast %cst_11 : f32 to vector<30x128xf32>
    %16 = arith.maximumf %14, %15 : vector<30x128xf32>
    %c0_12 = arith.constant 0 : index
    %c0_13 = arith.constant 0 : index
    %17 = vector.load %arg6[%c0_12, %c0_13] : memref<5x30xbf16, #tpu.memory_space<vmem>>, vector<5x30xbf16>
    %18 = arith.truncf %16 : vector<30x128xf32> to vector<30x128xbf16>
    %cst_14 = arith.constant dense<0.000000e+00> : vector<5x128xf32>
    %19 = tpu.matmul %17, %18, %cst_14 {dimension_numbers = #tpu.dot_dimension_numbers<[1], [0], [0], [1], [0, 0, 1, 1], [], []>} : vector<5x30xbf16>, vector<30x128xbf16>, vector<5x128xf32> -> vector<5x128xf32>
    %c0_15 = arith.constant 0 : index
    %c0_16 = arith.constant 0 : index
    %20 = vector.load %arg7[%c0_15, %c0_16] : memref<5x1xf32, #tpu.memory_space<vmem>>, vector<5x1xf32>
    %21 = vector.broadcast %20 : vector<5x1xf32> to vector<5x128xf32>
    %22 = arith.addf %19, %21 : vector<5x128xf32>
    %c0_17 = arith.constant 0 : index
    %c0_18 = arith.constant 0 : index
    %23 = vector.load %arg8[%c0_17, %c0_18] : memref<5x128xf32, #tpu.memory_space<vmem>>, vector<5x128xf32>
    tpu.vector_store %arg8[%c0_17, %c0_18], %22 {strides = array<i32>} : memref<5x128xf32, #tpu.memory_space<vmem>>, vector<5x128xf32>,
    return
  }
  func.func @transform_0(%arg0: i32) -> (i32, i32) {
    %c0_i32 = arith.constant 0 : i32
    %c0_i32_0 = arith.constant 0 : i32
    return %c0_i32, %arg0 : i32, i32
  }
  func.func @transform_1(%arg0: i32) -> (i32, i32) {
    %c0_i32 = arith.constant 0 : i32
    %c0_i32_0 = arith.constant 0 : i32
    %c0_i32_1 = arith.constant 0 : i32
    return %c0_i32, %c0_i32_0 : i32, i32
  }
  func.func @transform_2(%arg0: i32) -> (i32, i32) {
    %c0_i32 = arith.constant 0 : i32
    %c0_i32_0 = arith.constant 0 : i32
    %c0_i32_1 = arith.constant 0 : i32
    return %c0_i32, %c0_i32_0 : i32, i32
  }
  func.func @transform_3(%arg0: i32) -> (i32, i32) {
    %c0_i32 = arith.constant 0 : i32
    %c0_i32_0 = arith.constant 0 : i32
    %c0_i32_1 = arith.constant 0 : i32
    return %c0_i32, %c0_i32_0 : i32, i32
  }
  func.func @transform_4(%arg0: i32) -> (i32, i32) {
    %c0_i32 = arith.constant 0 : i32
    %c0_i32_0 = arith.constant 0 : i32
    %c0_i32_1 = arith.constant 0 : i32
    return %c0_i32, %c0_i32_0 : i32, i32
  }
  func.func @transform_5(%arg0: i32) -> (i32, i32) {
    %c0_i32 = arith.constant 0 : i32
    %c0_i32_0 = arith.constant 0 : i32
    %c0_i32_1 = arith.constant 0 : i32
    return %c0_i32, %c0_i32_0 : i32, i32
  }
  func.func @transform_6(%arg0: i32) -> (i32, i32) {
    %c0_i32 = arith.constant 0 : i32
    %c0_i32_0 = arith.constant 0 : i32
    %c0_i32_1 = arith.constant 0 : i32
    return %c0_i32, %c0_i32_0 : i32, i32
  }
  func.func @transform_7(%arg0: i32) -> (i32, i32) {
    %c0_i32 = arith.constant 0 : i32
    %c0_i32_0 = arith.constant 0 : i32
    return %c0_i32, %arg0 : i32, i32
  }
}

</mosaic_0001>

<llo_original>
// kernel: dqn_forward.1
$region0: #{dqn_forward.1}
  #allocation0 [shape = 'u32[]', space=smem, size = 0x4, offset = 0x4, fixed_abs, tag = 'smem constant byte address 0x4 - core index']
  #allocation1 [shape = 'u32[144,128]{1,0:T(1,128)}', space=vmem, size = 0x12000, scoped, tag = 'internal scratch']
  %s0 = inlined_call_operand.vmem [shape: f32[19,2], index: 0, kind: input, shape index: {}]
  %s1 = inlined_call_operand.vmem [shape: bf16[25,19], index: 1, kind: input, shape index: {}]
  %s2 = inlined_call_operand.vmem [shape: f32[25,1], index: 2, kind: input, shape index: {}]
  %s3 = inlined_call_operand.vmem [shape: bf16[30,25], index: 3, kind: input, shape index: {}]
  %s4 = inlined_call_operand.vmem [shape: f32[30,1], index: 4, kind: input, shape index: {}]
  %s5 = inlined_call_operand.vmem [shape: bf16[5,30], index: 5, kind: input, shape index: {}]
  %s6 = inlined_call_operand.vmem [shape: f32[5,1], index: 6, kind: input, shape index: {}]
  %s7 = inlined_call_operand.vmem [shape: f32[5,2], index: 7, kind: output, shape index: {}]
  %s8 = sld [smem:[#allocation0]]
  $region38: #{dqn_forward.1} parent=0
    _
  %s10 = ssub.s32 1, %s8
  %s11 = scalar_select 0, %s10, %s8
  // Predicated region
  $region2: #{dqn_forward.1} parent=0 // pred_check
    _
  $region3: #{dqn_forward.1} parent=0 // pred_check_branch
    %13 = sbr.rel (0) target = $region5
  $region4: #{dqn_forward.1} parent=0 // pred_region
    _
  $region5: #{dqn_forward.1} parent=0 // pred_fallthru
    _
  // Predicated region
  $region6: #{dqn_forward.1} parent=0 // pred_check
    _
  $region7: #{dqn_forward.1} parent=0 // pred_check_branch
    %15 = sbr.rel (0) target = $region9
  $region8: #{dqn_forward.1} parent=0 // pred_region
    _
  $region9: #{dqn_forward.1} parent=0 // pred_fallthru
    _
  // Predicated region
  $region10: #{dqn_forward.1} parent=0 // pred_check
    _
  $region11: #{dqn_forward.1} parent=0 // pred_check_branch
    %17 = sbr.rel (0) target = $region13
  $region12: #{dqn_forward.1} parent=0 // pred_region
    _
  $region13: #{dqn_forward.1} parent=0 // pred_fallthru
    _
  // Predicated region
  $region14: #{dqn_forward.1} parent=0 // pred_check
    _
  $region15: #{dqn_forward.1} parent=0 // pred_check_branch
    %19 = sbr.rel (0) target = $region17
  $region16: #{dqn_forward.1} parent=0 // pred_region
    _
  $region17: #{dqn_forward.1} parent=0 // pred_fallthru
    _
  // Predicated region
  $region18: #{dqn_forward.1} parent=0 // pred_check
    _
  $region19: #{dqn_forward.1} parent=0 // pred_check_branch
    %21 = sbr.rel (0) target = $region21
  $region20: #{dqn_forward.1} parent=0 // pred_region
    _
  $region21: #{dqn_forward.1} parent=0 // pred_fallthru
    _
  // Predicated region
  $region22: #{dqn_forward.1} parent=0 // pred_check
    _
  $region23: #{dqn_forward.1} parent=0 // pred_check_branch
    %23 = sbr.rel (0) target = $region25
  $region24: #{dqn_forward.1} parent=0 // pred_region
    _
  $region25: #{dqn_forward.1} parent=0 // pred_fallthru
    _
  // Predicated region
  $region26: #{dqn_forward.1} parent=0 // pred_check
    _
  $region27: #{dqn_forward.1} parent=0 // pred_check_branch
    %25 = sbr.rel (0) target = $region29
  $region28: #{dqn_forward.1} parent=0 // pred_region
    _
  $region29: #{dqn_forward.1} parent=0 // pred_fallthru
    _
  %v27 = vld [vmem:[%s0] sm:$0xff]
  %v28 = vld [vmem:[%s0 + $0x8] sm:$0xff]
  %v29 = vld [vmem:[%s0 + $0x10] sm:$0x7]
  %v30 = vpack.c.bf16 %v28, %v27
  %v31 = vpack.c.bf16 %v29, %v29
  %v32 = vld [vmem:[%s1] sm:$0xf]
  %v33 = vld [vmem:[%s1 + $0x4] sm:$0xf]
  %v34 = vld [vmem:[%s1 + $0x8] sm:$0xf]
  %v35 = vld [vmem:[%s1 + $0xc] sm:$0x1]
  %v36 = vld [vmem:[%s2] sm:$0xff]
  %v37 = vld [vmem:[%s2 + $0x8] sm:$0xff]
  %v38 = vld [vmem:[%s2 + $0x10] sm:$0xff]
  %v39 = vld [vmem:[%s2 + $0x18] sm:$0x1]
  %41 = vset.pattern.permute.xlu0 0
  %42 = vperm.xlu0 %41, %v36
  %v43 = vpop.permute.xlu0 %42
  %46 = vset.pattern.permute.xlu0 0
  %47 = vperm.xlu0 %46, %v37
  %v48 = vpop.permute.xlu0 %47
  %51 = vset.pattern.permute.xlu0 0
  %52 = vperm.xlu0 %51, %v38
  %v53 = vpop.permute.xlu0 %52
  %56 = vset.pattern.permute.xlu0 0
  %57 = vperm.xlu0 %56, %v39
  %v58 = vpop.permute.xlu0 %57
  %v64 = vunpack.c.l.b16 %v32
  %v65 = vunpack.c.l.b16 %v33
  %v66 = vunpack.c.l.b16 %v34
  %v67 = vunpack.c.l.b16 %v35
  %v68 = vpack.c.b16 %v65, %v64
  %v69 = vpack.c.b16 %v67, %v66
  %vm70 = vcmask 154624
  %v72 = vsel %vm70, %v68, 0
  %v75 = vsel %vm70, %v69, 0
  %vm77 = vcmask 1040384
  %vm78 = vcmask 1041408
  %v79 = vsel %vm77, 4294967295, 65535
  %v80 = vsel %vm78, %v79, 0
  %v82 = vand.u32 %v31, %v80
  %84 = vmatprep.subr.bf16.mxu0 0
  %85 = vmatpush1.bf16.msra.mxu0 0
  %86 = vmatprep.subr.bf16.mxu0 0
  %87 = vmatpush1.bf16.msra.mxu0 0
  %88 = vmatprep.subr.bf16.mxu0 0
  %89 = vmatpush1.bf16.msra.mxu0 0
  %90 = vmatprep.subr.bf16.mxu0 0
  %91 = vmatpush1.bf16.msra.mxu0 0
  %92 = vmatprep.subr.bf16.mxu0 0
  %93 = vmatpush1.bf16.msra.mxu0 0
  %94 = vmatprep.subr.bf16.mxu0 0
  %95 = vmatpush1.bf16.msra.mxu0 0
  %96 = vmatprep.subr.bf16.mxu0 0
  %97 = vmatpush1.bf16.msra.mxu0 %v82
  %98 = vmatprep.subr.bf16.mxu0 0
  %99 = vmatpush1.bf16.msra.mxu0 %v30
  %100 = vmatprep.subr.bf16.mxu0 0
  %101 = vmatpush2.bf16.msra.mxu0 0
  %102 = vmatprep.subr.bf16.mxu0 0
  %103 = vmatpush2.bf16.msra.mxu0 0
  %104 = vmatprep.subr.bf16.mxu0 0
  %105 = vmatpush2.bf16.msra.mxu0 0
  %106 = vmatprep.subr.bf16.mxu0 0
  %107 = vmatpush2.bf16.msra.mxu0 0
  %108 = vmatprep.subr.bf16.mxu0 0
  %109 = vmatpush2.bf16.msra.mxu0 0
  %110 = vmatprep.subr.bf16.mxu0 0
  %111 = vmatpush2.bf16.msra.mxu0 0
  %112 = vmatprep.subr.bf16.mxu0 0
  %113 = vmatpush2.bf16.msra.mxu0 0
  %114 = vmatprep.subr.bf16.mxu0 0
  %115 = vmatpush2.bf16.msra.mxu0 0
  %116 = vmatprep.mubr.bf16.mxu0 0
  %117 = vmatmul.mubr.bf16.gmra.mxu0 %v72
  %v118 = vpop.f32.mrf.mxu0
  %v119 = vadd.f32 %v43, %v118
  %v120 = vpop.f32.mrf.mxu0
  %v121 = vpop.f32.mrf.mxu0
  %v122 = vadd.f32 %v48, %v121
  %v123 = vpop.f32.mrf.mxu0
  %124 = vmatprep.mubr.bf16.mxu0 0
  %125 = vmatmul.mubr.bf16.gmra.mxu0 %v75
  %v126 = vpop.f32.mrf.mxu0
  %v127 = vadd.f32 %v53, %v126
  %v128 = vpop.f32.mrf.mxu0
  %v129 = vpop.f32.mrf.mxu0
  %v130 = vadd.f32 %v58, %v129
  %v131 = vpop.f32.mrf.mxu0
  %132 = vdwg.mxu0
  %v133 = vmax.f32 %v119, 0.0
  %v134 = vmax.f32 %v122, 0.0
  %v135 = vmax.f32 %v127, 0.0
  %v136 = vmax.f32 %v130, 0.0
  %v137 = vld [vmem:[%s3] sm:$0xf]
  %v138 = vld [vmem:[%s3 + $0x4] sm:$0xf]
  %v139 = vld [vmem:[%s3 + $0x8] sm:$0xf]
  %v140 = vld [vmem:[%s3 + $0xc] sm:$0x7]
  %v141 = vpack.c.bf16 %v134, %v133
  %v142 = vpack.c.bf16 %v136, %v135
  %v143 = vld [vmem:[%s4] sm:$0xff]
  %v144 = vld [vmem:[%s4 + $0x8] sm:$0xff]
  %v145 = vld [vmem:[%s4 + $0x10] sm:$0xff]
  %v146 = vld [vmem:[%s4 + $0x18] sm:$0x3f]
  %148 = vset.pattern.permute.xlu0 0
  %149 = vperm.xlu0 %148, %v143
  %v150 = vpop.permute.xlu0 %149
  %153 = vset.pattern.permute.xlu0 0
  %154 = vperm.xlu0 %153, %v144
  %v155 = vpop.permute.xlu0 %154
  %158 = vset.pattern.permute.xlu0 0
  %159 = vperm.xlu0 %158, %v145
  %v160 = vpop.permute.xlu0 %159
  %163 = vset.pattern.permute.xlu0 0
  %164 = vperm.xlu0 %163, %v146
  %v165 = vpop.permute.xlu0 %164
  %v171 = vunpack.c.l.b16 %v137
  %v172 = vunpack.c.l.b16 %v138
  %v173 = vunpack.c.l.b16 %v139
  %v174 = vunpack.c.l.b16 %v140
  %v175 = vpack.c.b16 %v172, %v171
  %v176 = vpack.c.b16 %v174, %v173
  %vm177 = vcmask 203776
  %v179 = vsel %vm177, %v175, 0
  %v182 = vsel %vm177, %v176, 0
  %vm184 = vcmask 1043456
  %vm185 = vcmask 1044480
  %v186 = vsel %vm184, 4294967295, 65535
  %v187 = vsel %vm185, %v186, 0
  %v189 = vand.u32 %v142, %v187
  %191 = vmatprep.subr.bf16.mxu0 0
  %192 = vmatpush1.bf16.msra.mxu0 0
  %193 = vmatprep.subr.bf16.mxu0 0
  %194 = vmatpush1.bf16.msra.mxu0 0
  %195 = vmatprep.subr.bf16.mxu0 0
  %196 = vmatpush1.bf16.msra.mxu0 0
  %197 = vmatprep.subr.bf16.mxu0 0
  %198 = vmatpush1.bf16.msra.mxu0 0
  %199 = vmatprep.subr.bf16.mxu0 0
  %200 = vmatpush1.bf16.msra.mxu0 0
  %201 = vmatprep.subr.bf16.mxu0 0
  %202 = vmatpush1.bf16.msra.mxu0 0
  %203 = vmatprep.subr.bf16.mxu0 0
  %204 = vmatpush1.bf16.msra.mxu0 %v189
  %205 = vmatprep.subr.bf16.mxu0 0
  %206 = vmatpush1.bf16.msra.mxu0 %v141
  %207 = vmatprep.subr.bf16.mxu0 0
  %208 = vmatpush2.bf16.msra.mxu0 0
  %209 = vmatprep.subr.bf16.mxu0 0
  %210 = vmatpush2.bf16.msra.mxu0 0
  %211 = vmatprep.subr.bf16.mxu0 0
  %212 = vmatpush2.bf16.msra.mxu0 0
  %213 = vmatprep.subr.bf16.mxu0 0
  %214 = vmatpush2.bf16.msra.mxu0 0
  %215 = vmatprep.subr.bf16.mxu0 0
  %216 = vmatpush2.bf16.msra.mxu0 0
  %217 = vmatprep.subr.bf16.mxu0 0
  %218 = vmatpush2.bf16.msra.mxu0 0
  %219 = vmatprep.subr.bf16.mxu0 0
  %220 = vmatpush2.bf16.msra.mxu0 0
  %221 = vmatprep.subr.bf16.mxu0 0
  %222 = vmatpush2.bf16.msra.mxu0 0
  %223 = vmatprep.mubr.bf16.mxu0 0
  %224 = vmatmul.mubr.bf16.gmra.mxu0 %v179
  %v225 = vpop.f32.mrf.mxu0
  %v226 = vadd.f32 %v150, %v225
  %v227 = vpop.f32.mrf.mxu0
  %v228 = vpop.f32.mrf.mxu0
  %v229 = vadd.f32 %v155, %v228
  %v230 = vpop.f32.mrf.mxu0
  %231 = vmatprep.mubr.bf16.mxu0 0
  %232 = vmatmul.mubr.bf16.gmra.mxu0 %v182
  %v233 = vpop.f32.mrf.mxu0
  %v234 = vadd.f32 %v160, %v233
  %v235 = vpop.f32.mrf.mxu0
  %v236 = vpop.f32.mrf.mxu0
  %v237 = vadd.f32 %v165, %v236
  %v238 = vpop.f32.mrf.mxu0
  %239 = vdwg.mxu0
  %v240 = vmax.f32 %v226, 0.0
  %v241 = vmax.f32 %v229, 0.0
  %v242 = vmax.f32 %v234, 0.0
  %v243 = vmax.f32 %v237, 0.0
  %v244 = vld [vmem:[%s5] sm:$0x7]
  %v245 = vpack.c.bf16 %v241, %v240
  %v246 = vpack.c.bf16 %v243, %v242
  %v247 = vld [vmem:[%s6] sm:$0x1f]
  %249 = vset.pattern.permute.xlu0 0
  %250 = vperm.xlu0 %249, %v247
  %v251 = vpop.permute.xlu0 %250
  %vm253 = vcmask 244736
  %v255 = vsel %vm253, %v244, 0
  %vm257 = vcmask 1046528
  %v259 = vsel %vm257, %v246, 0
  %261 = vmatprep.subr.bf16.mxu0 0
  %262 = vmatpush1.bf16.msra.mxu0 0
  %263 = vmatprep.subr.bf16.mxu0 0
  %264 = vmatpush1.bf16.msra.mxu0 0
  %265 = vmatprep.subr.bf16.mxu0 0
  %266 = vmatpush1.bf16.msra.mxu0 0
  %267 = vmatprep.subr.bf16.mxu0 0
  %268 = vmatpush1.bf16.msra.mxu0 0
  %269 = vmatprep.subr.bf16.mxu0 0
  %270 = vmatpush1.bf16.msra.mxu0 0
  %271 = vmatprep.subr.bf16.mxu0 0
  %272 = vmatpush1.bf16.msra.mxu0 0
  %273 = vmatprep.subr.bf16.mxu0 0
  %274 = vmatpush1.bf16.msra.mxu0 %v259
  %275 = vmatprep.subr.bf16.mxu0 0
  %276 = vmatpush1.bf16.msra.mxu0 %v245
  %277 = vmatprep.subr.bf16.mxu0 0
  %278 = vmatpush2.bf16.msra.mxu0 0
  %279 = vmatprep.subr.bf16.mxu0 0
  %280 = vmatpush2.bf16.msra.mxu0 0
  %281 = vmatprep.subr.bf16.mxu0 0
  %282 = vmatpush2.bf16.msra.mxu0 0
  %283 = vmatprep.subr.bf16.mxu0 0
  %284 = vmatpush2.bf16.msra.mxu0 0
  %285 = vmatprep.subr.bf16.mxu0 0
  %286 = vmatpush2.bf16.msra.mxu0 0
  %287 = vmatprep.subr.bf16.mxu0 0
  %288 = vmatpush2.bf16.msra.mxu0 0
  %289 = vmatprep.subr.bf16.mxu0 0
  %290 = vmatpush2.bf16.msra.mxu0 0
  %291 = vmatprep.subr.bf16.mxu0 0
  %292 = vmatpush2.bf16.msra.mxu0 0
  %293 = vmatprep.mubr.bf16.mxu0 0
  %294 = vmatmul.mubr.bf16.gmra.mxu0 %v255
  %v295 = vpop.f32.mrf.mxu0
  %v296 = vadd.f32 %v251, %v295
  %v297 = vpop.f32.mrf.mxu0
  %v298 = vpop.f32.mrf.mxu0
  %v299 = vpop.f32.mrf.mxu0
  %300 = vdwg.mxu0
  %301 = vst [vmem:[%s7] sm:$0x1f] %v296
  // Predicated region
  $region30: #{dqn_forward.1} parent=0 // pred_check
    _
  $region31: #{dqn_forward.1} parent=0 // pred_check_branch
    %303 = sbr.rel (0) target = $region33
  $region32: #{dqn_forward.1} parent=0 // pred_region
    _
  $region33: #{dqn_forward.1} parent=0 // pred_fallthru
    _
  // Predicated region
  $region34: #{dqn_forward.1} parent=0 // pred_check
    _
  $region35: #{dqn_forward.1} parent=0 // pred_check_branch
    %305 = sbr.rel (0) target = $region37
  $region36: #{dqn_forward.1} parent=0 // pred_region
    _
  $region37: #{dqn_forward.1} parent=0 // pred_fallthru
    _

</llo_original>
